<compile_context>
chip_gen: v7x
topology: tpu7x:2x2x1
jax: 0.10.0
libtpu: 0.0.40
codegen_flags: <defaults>
</compile_context>

<pallas_src>
import math

import jax
import jax.numpy as jnp
from jax.experimental import pallas as pl
from jax.experimental.pallas import tpu as pltpu


# ---------------------------------------------------------------------------
# Pallas kernel: single invocation, all codebooks.
#   w_ref : (T, C, K)  prompt_weight
#   cb_ref: (C, K, S)  codebook_prompt
#   o_ref : (T, C*S)   final embedding layout (token_dim-wide rows, lane-dense)
# ---------------------------------------------------------------------------
def scpp_quantize_kernel(w_ref, cb_ref, o_ref):
    C = cb_ref.shape[0]
    # Unrolled per-codebook matmuls (MXU), concatenated along the lane axis so
    # the output is one full token_dim-wide slab -> single unmasked store.
    parts = [
        jnp.dot(w_ref[:, c, :], cb_ref[c], preferred_element_type=jnp.float32)
        for c in range(C)
    ]
    o_ref[...] = jnp.concatenate(parts, axis=-1).astype(o_ref.dtype)


def scpp_prompt_embeddings(prompt_weight, codebook_prompt, batch_size):
    """Compute the (B, T, token_dim) prompt embeddings, scpp=True path."""
    T, C, K = prompt_weight.shape
    C2, K2, S = codebook_prompt.shape
    assert C == C2 and K == K2
    token_dim = C * S

    itemsize = jnp.dtype(jnp.float32).itemsize
    cost = pl.CostEstimate(
        flops=2 * T * C * K * S,
        transcendentals=0,
        bytes_accessed=itemsize * (T * C * K + C * K * S + T * token_dim),
    )

    embedding = pl.pallas_call(
        scpp_quantize_kernel,
        out_shape=jax.ShapeDtypeStruct((T, token_dim), jnp.float32),
        in_specs=[
            pl.BlockSpec(memory_space=pltpu.MemorySpace.VMEM),
            pl.BlockSpec(memory_space=pltpu.MemorySpace.VMEM),
        ],
        out_specs=pl.BlockSpec(memory_space=pltpu.MemorySpace.VMEM),
        cost_estimate=cost,
    )(prompt_weight, codebook_prompt)

    # embedding.unsqueeze(0).repeat(B, 1, 1): lazy XLA broadcast, not materialized
    # in-kernel.
    return jnp.broadcast_to(embedding[None], (batch_size, T, token_dim))


# ---------------------------------------------------------------------------
# Deterministic parameter init mimicking nn.init.kaiming_uniform_(a=sqrt(5)):
#   bound = 1 / sqrt(fan_in), fan_in = prod(shape[1:]) for >2-D tensors.
# ---------------------------------------------------------------------------
def kaiming_uniform_a5(key, shape, dtype=jnp.float32):
    fan_in = 1
    for d in shape[1:]:
        fan_in *= d
    bound = 1.0 / math.sqrt(fan_in)
    return jax.random.uniform(key, shape, dtype, minval=-bound, maxval=bound)


if __name__ == "__main__":
    # --- config (small, consistent with the module) ---
    num_virtual_tokens = 8
    num_transformer_submodules = 1
    token_dim = 32
    sub_dim_scpp = 8
    codebook_size_scpp = 16
    batch_size = 2
    max_length = 16
    r = 4
    lora_alpha = 8

    total_virtual_tokens = num_virtual_tokens * num_transformer_submodules
    num_codebooks_prompt = token_dim // sub_dim_scpp

    key = jax.random.PRNGKey(0)
    k_pw, k_cb, k_la = jax.random.split(key, 3)

    # scpp parameters (used by forward)
    prompt_weight = kaiming_uniform_a5(
        k_pw, (total_virtual_tokens, num_codebooks_prompt, codebook_size_scpp)
    )
    codebook_prompt = kaiming_uniform_a5(
        k_cb, (num_codebooks_prompt, codebook_size_scpp, sub_dim_scpp)
    )

    # LoRA parameters (initialized per __init__ but unused in forward()).
    lora_embedding_A = kaiming_uniform_a5(k_la, (max_length, r))
    lora_embedding_B = jnp.zeros((r, token_dim), jnp.float32)
    scaling = lora_alpha / math.sqrt(r)  # noqa: F841  (not used in forward)
    # TODO(synk): PromptTuningInit.TEXT / pretrain_init branches load tokenizer &
    # checkpoints from disk; omitted (RANDOM init used instead).

    # indices as in the docstring: arange(T) tiled over batch (only shape[0] is used)
    indices = jnp.tile(jnp.arange(total_virtual_tokens)[None, :], (batch_size, 1))

    out = scpp_prompt_embeddings(prompt_weight, codebook_prompt, indices.shape[0])
    out = jax.block_until_ready(out)

    # sanity check against a pure-JAX reference of the PyTorch forward
    ref_q = jnp.sum(
        prompt_weight[:, :, :, None] * codebook_prompt[None, :, :, :], axis=2
    ).reshape(total_virtual_tokens, -1)
    ref = jnp.broadcast_to(ref_q[None], (batch_size, total_virtual_tokens, token_dim))
    assert out.shape == (batch_size, total_virtual_tokens, token_dim)
    assert jnp.allclose(out, ref, atol=1e-5, rtol=1e-5)

    print("KERNEL_OK")
</pallas_src>

<mosaic_0001>
module attributes {stable_mosaic.version = 11 : i64} {
  func.func @scpp_quantize_kernel(%arg0: memref<8x4x16xf32, #tpu.memory_space<vmem>>, %arg1: memref<4x16x8xf32, #tpu.memory_space<vmem>>, %arg2: memref<8x32xf32, #tpu.memory_space<vmem>>) attributes {dimension_semantics = [], scalar_prefetch = 0 : i64, scratch_operands = 0 : i64, tpu.core_type = #tpu.core_type<tc>} {
    %c0 = arith.constant 0 : index
    %c0_0 = arith.constant 0 : index
    %c0_1 = arith.constant 0 : index
    %0 = vector.load %arg0[%c0, %c0_0, %c0_1] : memref<8x4x16xf32, #tpu.memory_space<vmem>>, vector<8x1x16xf32>
    %1 = vector.shape_cast %0 : vector<8x1x16xf32> to vector<8x16xf32>
    %c0_2 = arith.constant 0 : index
    %c0_3 = arith.constant 0 : index
    %c0_4 = arith.constant 0 : index
    %2 = vector.load %arg1[%c0_2, %c0_3, %c0_4] : memref<4x16x8xf32, #tpu.memory_space<vmem>>, vector<1x16x8xf32>
    %3 = vector.shape_cast %2 : vector<1x16x8xf32> to vector<16x8xf32>
    %cst = arith.constant dense<0.000000e+00> : vector<8x8xf32>
    %4 = tpu.matmul %1, %3, %cst {dimension_numbers = #tpu.dot_dimension_numbers<[1], [0], [0], [1], [0, 0, 1, 1], [], []>} : vector<8x16xf32>, vector<16x8xf32>, vector<8x8xf32> -> vector<8x8xf32>
    %c0_5 = arith.constant 0 : index
    %c1 = arith.constant 1 : index
    %c0_6 = arith.constant 0 : index
    %5 = vector.load %arg0[%c0_5, %c1, %c0_6] : memref<8x4x16xf32, #tpu.memory_space<vmem>>, vector<8x1x16xf32>
    %6 = vector.shape_cast %5 : vector<8x1x16xf32> to vector<8x16xf32>
    %c1_7 = arith.constant 1 : index
    %c0_8 = arith.constant 0 : index
    %c0_9 = arith.constant 0 : index
    %7 = vector.load %arg1[%c1_7, %c0_8, %c0_9] : memref<4x16x8xf32, #tpu.memory_space<vmem>>, vector<1x16x8xf32>
    %8 = vector.shape_cast %7 : vector<1x16x8xf32> to vector<16x8xf32>
    %cst_10 = arith.constant dense<0.000000e+00> : vector<8x8xf32>
    %9 = tpu.matmul %6, %8, %cst_10 {dimension_numbers = #tpu.dot_dimension_numbers<[1], [0], [0], [1], [0, 0, 1, 1], [], []>} : vector<8x16xf32>, vector<16x8xf32>, vector<8x8xf32> -> vector<8x8xf32>
    %c0_11 = arith.constant 0 : index
    %c2 = arith.constant 2 : index
    %c0_12 = arith.constant 0 : index
    %10 = vector.load %arg0[%c0_11, %c2, %c0_12] : memref<8x4x16xf32, #tpu.memory_space<vmem>>, vector<8x1x16xf32>
    %11 = vector.shape_cast %10 : vector<8x1x16xf32> to vector<8x16xf32>
    %c2_13 = arith.constant 2 : index
    %c0_14 = arith.constant 0 : index
    %c0_15 = arith.constant 0 : index
    %12 = vector.load %arg1[%c2_13, %c0_14, %c0_15] : memref<4x16x8xf32, #tpu.memory_space<vmem>>, vector<1x16x8xf32>
    %13 = vector.shape_cast %12 : vector<1x16x8xf32> to vector<16x8xf32>
    %cst_16 = arith.constant dense<0.000000e+00> : vector<8x8xf32>
    %14 = tpu.matmul %11, %13, %cst_16 {dimension_numbers = #tpu.dot_dimension_numbers<[1], [0], [0], [1], [0, 0, 1, 1], [], []>} : vector<8x16xf32>, vector<16x8xf32>, vector<8x8xf32> -> vector<8x8xf32>
    %c0_17 = arith.constant 0 : index
    %c3 = arith.constant 3 : index
    %c0_18 = arith.constant 0 : index
    %15 = vector.load %arg0[%c0_17, %c3, %c0_18] : memref<8x4x16xf32, #tpu.memory_space<vmem>>, vector<8x1x16xf32>
    %16 = vector.shape_cast %15 : vector<8x1x16xf32> to vector<8x16xf32>
    %c3_19 = arith.constant 3 : index
    %c0_20 = arith.constant 0 : index
    %c0_21 = arith.constant 0 : index
    %17 = vector.load %arg1[%c3_19, %c0_20, %c0_21] : memref<4x16x8xf32, #tpu.memory_space<vmem>>, vector<1x16x8xf32>
    %18 = vector.shape_cast %17 : vector<1x16x8xf32> to vector<16x8xf32>
    %cst_22 = arith.constant dense<0.000000e+00> : vector<8x8xf32>
    %19 = tpu.matmul %16, %18, %cst_22 {dimension_numbers = #tpu.dot_dimension_numbers<[1], [0], [0], [1], [0, 0, 1, 1], [], []>} : vector<8x16xf32>, vector<16x8xf32>, vector<8x8xf32> -> vector<8x8xf32>
    %20 = tpu.concatenate %4, %9, %14, %19 in 1 : vector<8x8xf32>, vector<8x8xf32>, vector<8x8xf32>, vector<8x8xf32> -> vector<8x32xf32>
    %c0_23 = arith.constant 0 : index
    %c0_24 = arith.constant 0 : index
    %21 = vector.load %arg2[%c0_23, %c0_24] : memref<8x32xf32, #tpu.memory_space<vmem>>, vector<8x32xf32>
    tpu.vector_store %arg2[%c0_23, %c0_24], %20 {strides = array<i32>} : memref<8x32xf32, #tpu.memory_space<vmem>>, vector<8x32xf32>,
    return
  }
}

</mosaic_0001>

<llo_original>
// kernel: tpu_custom_call.1
$region0: #{tpu_custom_call.1}
  #allocation0 [shape = 'u32[]', space=smem, size = 0x4, offset = 0x4, fixed_abs, tag = 'smem constant byte address 0x4 - core index']
  #allocation1 [shape = 'u32[144,128]{1,0:T(1,128)}', space=vmem, size = 0x12000, scoped, tag = 'internal scratch']
  %s0 = inlined_call_operand.vmem [shape: f32[8,4,16], index: 0, kind: input, shape index: {}]
  %s1 = inlined_call_operand.vmem [shape: f32[4,16,8], index: 1, kind: input, shape index: {}]
  %s2 = inlined_call_operand.hbm [shape: f32[8,32], index: 2, kind: output, shape index: {}]
  %s3 = sld [smem:[#allocation0]]
  $region18: #{tpu_custom_call.1} parent=0
    _
  %s5 = ssub.s32 1, %s3
  %s6 = scalar_select 0, %s5, %s3
  $region1: #{tpu_custom_call.1} parent=0
    #allocation2 [shape = 'u8[4096]{0}', space=vmem, size = 0x1000, scoped, tag = 'output window, operand 0, single buffered']
    #allocation3 [shape = 's32[1]{0}', space=sflag, size = 0x4, scoped, tag = 'scoped memory for tpu_custom_call.1']
    %7 = vsyncpa [#allocation3], 0
    // Predicated region
    $region2: #{tpu_custom_call.1} parent=1 // pred_check
      _
    $region3: #{tpu_custom_call.1} parent=1 // pred_check_branch
      %9 = sbr.rel (0) target = $region5
    $region4: #{tpu_custom_call.1} parent=1 // pred_region
      _
    $region5: #{tpu_custom_call.1} parent=1 // pred_fallthru
      _
    // Predicated region
    $region6: #{tpu_custom_call.1} parent=1 // pred_check
      _
    $region7: #{tpu_custom_call.1} parent=1 // pred_check_branch
      %11 = sbr.rel (0) target = $region9
    $region8: #{tpu_custom_call.1} parent=1 // pred_region
      _
    $region9: #{tpu_custom_call.1} parent=1 // pred_fallthru
      _
    %v12 = vld [vmem:[%s0] sm:$0x1]
    %v13 = vld [vmem:[%s0 + $0x4] sm:$0x1]
    %v14 = vld [vmem:[%s0 + $0x8] sm:$0x1]
    %v15 = vld [vmem:[%s0 + $0xc] sm:$0x1]
    %v16 = vld [vmem:[%s0 + $0x10] sm:$0x1]
    %v17 = vld [vmem:[%s0 + $0x14] sm:$0x1]
    %v18 = vld [vmem:[%s0 + $0x18] sm:$0x1]
    %v19 = vld [vmem:[%s0 + $0x1c] sm:$0x1]
    %v20 = vld [vmem:[%s1] sm:$0xff]
    %v21 = vld [vmem:[%s1 + $0x8] sm:$0xff]
    %v30 = vrot.slane %v13, 7
    %vm31 = vcmask 1041409
    %v32 = vsel %vm31, %v30, %v12
    %v33 = vrot.slane %v14, 6
    %vm34 = vcmask 1042434
    %v35 = vsel %vm34, %v33, %v32
    %v36 = vrot.slane %v15, 5
    %vm37 = vcmask 1043459
    %v38 = vsel %vm37, %v36, %v35
    %v39 = vrot.slane %v16, 4
    %vm40 = vcmask 1044484
    %v41 = vsel %vm40, %v39, %v38
    %v42 = vrot.slane %v17, 3
    %vm43 = vcmask 1045509
    %v44 = vsel %vm43, %v42, %v41
    %v45 = vrot.slane %v18, 2
    %vm46 = vcmask 1046534
    %v47 = vsel %vm46, %v45, %v44
    %v48 = vrot.slane %v19, 1
    %vm49 = vcmask 1047559
    %v50 = vsel %vm49, %v48, %v47
    %vm51 = vcmask 130048
    %v52 = vsel %vm51, %v50, 0
    %54 = vmatprep.subr.mxu0 0.0
    %55 = vmatpush1.msra.mxu0 %v20
    %56 = vmatprep.subr.mxu0 0.0
    %57 = vmatpush1.msra.mxu0 %v21
    %58 = vmatprep.subr.mxu0 0.0
    %59 = vmatpush1.msra.mxu0 0.0
    %60 = vmatprep.subr.mxu0 0.0
    %61 = vmatpush1.msra.mxu0 0.0
    %62 = vmatprep.subr.mxu0 0.0
    %63 = vmatpush1.msra.mxu0 0.0
    %64 = vmatprep.subr.mxu0 0.0
    %65 = vmatpush1.msra.mxu0 0.0
    %66 = vmatprep.subr.mxu0 0.0
    %67 = vmatpush1.msra.mxu0 0.0
    %68 = vmatprep.subr.mxu0 0.0
    %69 = vmatpush1.msra.mxu0 0.0
    %70 = vmatprep.subr.mxu0 0.0
    %71 = vmatpush1.msra.mxu0 0.0
    %72 = vmatprep.subr.mxu0 0.0
    %73 = vmatpush1.msra.mxu0 0.0
    %74 = vmatprep.subr.mxu0 0.0
    %75 = vmatpush1.msra.mxu0 0.0
    %76 = vmatprep.subr.mxu0 0.0
    %77 = vmatpush1.msra.mxu0 0.0
    %78 = vmatprep.subr.mxu0 0.0
    %79 = vmatpush1.msra.mxu0 0.0
    %80 = vmatprep.subr.mxu0 0.0
    %81 = vmatpush1.msra.mxu0 0.0
    %82 = vmatprep.subr.mxu0 0.0
    %83 = vmatpush1.msra.mxu0 0.0
    %84 = vmatprep.subr.mxu0 0.0
    %85 = vmatpush1.msra.mxu0 0.0
    %86 = vmatprep.subr.mxu0 0.0
    %87 = vmatpush1.msra.mxu0 0.0
    %88 = vmatprep.subr.mxu0 0.0
    %89 = vmatpush1.msra.mxu0 0.0
    %90 = vmatprep.subr.mxu0 0.0
    %91 = vmatpush1.msra.mxu0 0.0
    %92 = vmatprep.subr.mxu0 0.0
    %93 = vmatpush1.msra.mxu0 0.0
    %94 = vmatprep.subr.mxu0 0.0
    %95 = vmatpush1.msra.mxu0 0.0
    %96 = vmatprep.subr.mxu0 0.0
    %97 = vmatpush1.msra.mxu0 0.0
    %98 = vmatprep.subr.mxu0 0.0
    %99 = vmatpush1.msra.mxu0 0.0
    %100 = vmatprep.subr.mxu0 0.0
    %101 = vmatpush1.msra.mxu0 0.0
    %102 = vmatprep.subr.mxu0 0.0
    %103 = vmatpush1.msra.mxu0 0.0
    %104 = vmatprep.subr.mxu0 0.0
    %105 = vmatpush1.msra.mxu0 0.0
    %106 = vmatprep.subr.mxu0 0.0
    %107 = vmatpush1.msra.mxu0 0.0
    %108 = vmatprep.subr.mxu0 0.0
    %109 = vmatpush1.msra.mxu0 0.0
    %110 = vmatprep.subr.mxu0 0.0
    %111 = vmatpush1.msra.mxu0 0.0
    %112 = vmatprep.subr.mxu0 0.0
    %113 = vmatpush1.msra.mxu0 0.0
    %114 = vmatprep.subr.mxu0 0.0
    %115 = vmatpush1.msra.mxu0 0.0
    %116 = vmatprep.subr.mxu0 0.0
    %117 = vmatpush1.msra.mxu0 0.0
    %118 = vmatprep.mubr.f32.mxu0 0.0
    %119 = vmatmul.mubr.f32.gmra.mrb[0].mxu0 %v52
    %v120 = vpop.f32.mrb[0].mxu0
    %v121 = vadd.f32 0.0, %v120
    %v122 = vpop.f32.mrb[0].mxu0
    %123 = vdwg.mxu0
    %v124 = vld [vmem:[%s0 + $0x1] sm:$0x1]
    %v125 = vld [vmem:[%s0 + $0x5] sm:$0x1]
    %v126 = vld [vmem:[%s0 + $0x9] sm:$0x1]
    %v127 = vld [vmem:[%s0 + $0xd] sm:$0x1]
    %v128 = vld [vmem:[%s0 + $0x11] sm:$0x1]
    %v129 = vld [vmem:[%s0 + $0x15] sm:$0x1]
    %v130 = vld [vmem:[%s0 + $0x19] sm:$0x1]
    %v131 = vld [vmem:[%s0 + $0x1d] sm:$0x1]
    %s132 = scalar_lea.vmem %s1, 16
    %v133 = vld [vmem:[%s132] sm:$0xff]
    %v134 = vld [vmem:[%s132 + $0x8] sm:$0xff]
    %v143 = vrot.slane %v125, 7
    %v144 = vsel %vm31, %v143, %v124
    %v145 = vrot.slane %v126, 6
    %v146 = vsel %vm34, %v145, %v144
    %v147 = vrot.slane %v127, 5
    %v148 = vsel %vm37, %v147, %v146
    %v149 = vrot.slane %v128, 4
    %v150 = vsel %vm40, %v149, %v148
    %v151 = vrot.slane %v129, 3
    %v152 = vsel %vm43, %v151, %v150
    %v153 = vrot.slane %v130, 2
    %v154 = vsel %vm46, %v153, %v152
    %v155 = vrot.slane %v131, 1
    %v156 = vsel %vm49, %v155, %v154
    %v157 = vsel %vm51, %v156, 0
    %159 = vmatprep.subr.mxu0 0.0
    %160 = vmatpush1.msra.mxu0 %v133
    %161 = vmatprep.subr.mxu0 0.0
    %162 = vmatpush1.msra.mxu0 %v134
    %163 = vmatprep.subr.mxu0 0.0
    %164 = vmatpush1.msra.mxu0 0.0
    %165 = vmatprep.subr.mxu0 0.0
    %166 = vmatpush1.msra.mxu0 0.0
    %167 = vmatprep.subr.mxu0 0.0
    %168 = vmatpush1.msra.mxu0 0.0
    %169 = vmatprep.subr.mxu0 0.0
    %170 = vmatpush1.msra.mxu0 0.0
    %171 = vmatprep.subr.mxu0 0.0
    %172 = vmatpush1.msra.mxu0 0.0
    %173 = vmatprep.subr.mxu0 0.0
    %174 = vmatpush1.msra.mxu0 0.0
    %175 = vmatprep.subr.mxu0 0.0
    %176 = vmatpush1.msra.mxu0 0.0
    %177 = vmatprep.subr.mxu0 0.0
    %178 = vmatpush1.msra.mxu0 0.0
    %179 = vmatprep.subr.mxu0 0.0
    %180 = vmatpush1.msra.mxu0 0.0
    %181 = vmatprep.subr.mxu0 0.0
    %182 = vmatpush1.msra.mxu0 0.0
    %183 = vmatprep.subr.mxu0 0.0
    %184 = vmatpush1.msra.mxu0 0.0
    %185 = vmatprep.subr.mxu0 0.0
    %186 = vmatpush1.msra.mxu0 0.0
    %187 = vmatprep.subr.mxu0 0.0
    %188 = vmatpush1.msra.mxu0 0.0
    %189 = vmatprep.subr.mxu0 0.0
    %190 = vmatpush1.msra.mxu0 0.0
    %191 = vmatprep.subr.mxu0 0.0
    %192 = vmatpush1.msra.mxu0 0.0
    %193 = vmatprep.subr.mxu0 0.0
    %194 = vmatpush1.msra.mxu0 0.0
    %195 = vmatprep.subr.mxu0 0.0
    %196 = vmatpush1.msra.mxu0 0.0
    %197 = vmatprep.subr.mxu0 0.0
    %198 = vmatpush1.msra.mxu0 0.0
    %199 = vmatprep.subr.mxu0 0.0
    %200 = vmatpush1.msra.mxu0 0.0
    %201 = vmatprep.subr.mxu0 0.0
    %202 = vmatpush1.msra.mxu0 0.0
    %203 = vmatprep.subr.mxu0 0.0
    %204 = vmatpush1.msra.mxu0 0.0
    %205 = vmatprep.subr.mxu0 0.0
    %206 = vmatpush1.msra.mxu0 0.0
    %207 = vmatprep.subr.mxu0 0.0
    %208 = vmatpush1.msra.mxu0 0.0
    %209 = vmatprep.subr.mxu0 0.0
    %210 = vmatpush1.msra.mxu0 0.0
    %211 = vmatprep.subr.mxu0 0.0
    %212 = vmatpush1.msra.mxu0 0.0
    %213 = vmatprep.subr.mxu0 0.0
    %214 = vmatpush1.msra.mxu0 0.0
    %215 = vmatprep.subr.mxu0 0.0
    %216 = vmatpush1.msra.mxu0 0.0
    %217 = vmatprep.subr.mxu0 0.0
    %218 = vmatpush1.msra.mxu0 0.0
    %219 = vmatprep.subr.mxu0 0.0
    %220 = vmatpush1.msra.mxu0 0.0
    %221 = vmatprep.subr.mxu0 0.0
    %222 = vmatpush1.msra.mxu0 0.0
    %223 = vmatprep.mubr.f32.mxu0 0.0
    %224 = vmatmul.mubr.f32.gmra.mrb[0].mxu0 %v157
    %v225 = vpop.f32.mrb[0].mxu0
    %v226 = vadd.f32 0.0, %v225
    %v227 = vpop.f32.mrb[0].mxu0
    %228 = vdwg.mxu0
    %v229 = vld [vmem:[%s0 + $0x2] sm:$0x1]
    %v230 = vld [vmem:[%s0 + $0x6] sm:$0x1]
    %v231 = vld [vmem:[%s0 + $0xa] sm:$0x1]
    %v232 = vld [vmem:[%s0 + $0xe] sm:$0x1]
    %v233 = vld [vmem:[%s0 + $0x12] sm:$0x1]
    %v234 = vld [vmem:[%s0 + $0x16] sm:$0x1]
    %v235 = vld [vmem:[%s0 + $0x1a] sm:$0x1]
    %v236 = vld [vmem:[%s0 + $0x1e] sm:$0x1]
    %s237 = scalar_lea.vmem %s1, 32
    %v238 = vld [vmem:[%s237] sm:$0xff]
    %v239 = vld [vmem:[%s237 + $0x8] sm:$0xff]
    %v248 = vrot.slane %v230, 7
    %v249 = vsel %vm31, %v248, %v229
    %v250 = vrot.slane %v231, 6
    %v251 = vsel %vm34, %v250, %v249
    %v252 = vrot.slane %v232, 5
    %v253 = vsel %vm37, %v252, %v251
    %v254 = vrot.slane %v233, 4
    %v255 = vsel %vm40, %v254, %v253
    %v256 = vrot.slane %v234, 3
    %v257 = vsel %vm43, %v256, %v255
    %v258 = vrot.slane %v235, 2
    %v259 = vsel %vm46, %v258, %v257
    %v260 = vrot.slane %v236, 1
    %v261 = vsel %vm49, %v260, %v259
    %v262 = vsel %vm51, %v261, 0
    %264 = vmatprep.subr.mxu0 0.0
    %265 = vmatpush1.msra.mxu0 %v238
    %266 = vmatprep.subr.mxu0 0.0
    %267 = vmatpush1.msra.mxu0 %v239
    %268 = vmatprep.subr.mxu0 0.0
    %269 = vmatpush1.msra.mxu0 0.0
    %270 = vmatprep.subr.mxu0 0.0
    %271 = vmatpush1.msra.mxu0 0.0
    %272 = vmatprep.subr.mxu0 0.0
    %273 = vmatpush1.msra.mxu0 0.0
    %274 = vmatprep.subr.mxu0 0.0
    %275 = vmatpush1.msra.mxu0 0.0
    %276 = vmatprep.subr.mxu0 0.0
    %277 = vmatpush1.msra.mxu0 0.0
    %278 = vmatprep.subr.mxu0 0.0
    %279 = vmatpush1.msra.mxu0 0.0
    %280 = vmatprep.subr.mxu0 0.0
    %281 = vmatpush1.msra.mxu0 0.0
    %282 = vmatprep.subr.mxu0 0.0
    %283 = vmatpush1.msra.mxu0 0.0
    %284 = vmatprep.subr.mxu0 0.0
    %285 = vmatpush1.msra.mxu0 0.0
    %286 = vmatprep.subr.mxu0 0.0
    %287 = vmatpush1.msra.mxu0 0.0
    %288 = vmatprep.subr.mxu0 0.0
    %289 = vmatpush1.msra.mxu0 0.0
    %290 = vmatprep.subr.mxu0 0.0
    %291 = vmatpush1.msra.mxu0 0.0
    %292 = vmatprep.subr.mxu0 0.0
    %293 = vmatpush1.msra.mxu0 0.0
    %294 = vmatprep.subr.mxu0 0.0
    %295 = vmatpush1.msra.mxu0 0.0
    %296 = vmatprep.subr.mxu0 0.0
    %297 = vmatpush1.msra.mxu0 0.0
    %298 = vmatprep.subr.mxu0 0.0
    %299 = vmatpush1.msra.mxu0 0.0
    %300 = vmatprep.subr.mxu0 0.0
    %301 = vmatpush1.msra.mxu0 0.0
    %302 = vmatprep.subr.mxu0 0.0
    %303 = vmatpush1.msra.mxu0 0.0
    %304 = vmatprep.subr.mxu0 0.0
    %305 = vmatpush1.msra.mxu0 0.0
    %306 = vmatprep.subr.mxu0 0.0
    %307 = vmatpush1.msra.mxu0 0.0
    %308 = vmatprep.subr.mxu0 0.0
    %309 = vmatpush1.msra.mxu0 0.0
    %310 = vmatprep.subr.mxu0 0.0
    %311 = vmatpush1.msra.mxu0 0.0
    %312 = vmatprep.subr.mxu0 0.0
    %313 = vmatpush1.msra.mxu0 0.0
    %314 = vmatprep.subr.mxu0 0.0
    %315 = vmatpush1.msra.mxu0 0.0
    %316 = vmatprep.subr.mxu0 0.0
    %317 = vmatpush1.msra.mxu0 0.0
    %318 = vmatprep.subr.mxu0 0.0
    %319 = vmatpush1.msra.mxu0 0.0
    %320 = vmatprep.subr.mxu0 0.0
    %321 = vmatpush1.msra.mxu0 0.0
    %322 = vmatprep.subr.mxu0 0.0
    %323 = vmatpush1.msra.mxu0 0.0
    %324 = vmatprep.subr.mxu0 0.0
    %325 = vmatpush1.msra.mxu0 0.0
    %326 = vmatprep.subr.mxu0 0.0
    %327 = vmatpush1.msra.mxu0 0.0
    %328 = vmatprep.mubr.f32.mxu0 0.0
    %329 = vmatmul.mubr.f32.gmra.mrb[0].mxu0 %v262
    %v330 = vpop.f32.mrb[0].mxu0
    %v331 = vadd.f32 0.0, %v330
    %v332 = vpop.f32.mrb[0].mxu0
    %333 = vdwg.mxu0
    %v334 = vld [vmem:[%s0 + $0x3] sm:$0x1]
    %v335 = vld [vmem:[%s0 + $0x7] sm:$0x1]
    %v336 = vld [vmem:[%s0 + $0xb] sm:$0x1]
    %v337 = vld [vmem:[%s0 + $0xf] sm:$0x1]
    %v338 = vld [vmem:[%s0 + $0x13] sm:$0x1]
    %v339 = vld [vmem:[%s0 + $0x17] sm:$0x1]
    %v340 = vld [vmem:[%s0 + $0x1b] sm:$0x1]
    %v341 = vld [vmem:[%s0 + $0x1f] sm:$0x1]
    %s342 = scalar_lea.vmem %s1, 48
    %v343 = vld [vmem:[%s342] sm:$0xff]
    %v344 = vld [vmem:[%s342 + $0x8] sm:$0xff]
    %v353 = vrot.slane %v335, 7
    %v354 = vsel %vm31, %v353, %v334
    %v355 = vrot.slane %v336, 6
    %v356 = vsel %vm34, %v355, %v354
    %v357 = vrot.slane %v337, 5
    %v358 = vsel %vm37, %v357, %v356
    %v359 = vrot.slane %v338, 4
    %v360 = vsel %vm40, %v359, %v358
    %v361 = vrot.slane %v339, 3
    %v362 = vsel %vm43, %v361, %v360
    %v363 = vrot.slane %v340, 2
    %v364 = vsel %vm46, %v363, %v362
    %v365 = vrot.slane %v341, 1
    %v366 = vsel %vm49, %v365, %v364
    %v367 = vsel %vm51, %v366, 0
    %369 = vmatprep.subr.mxu0 0.0
    %370 = vmatpush1.msra.mxu0 %v343
    %371 = vmatprep.subr.mxu0 0.0
    %372 = vmatpush1.msra.mxu0 %v344
    %373 = vmatprep.subr.mxu0 0.0
    %374 = vmatpush1.msra.mxu0 0.0
    %375 = vmatprep.subr.mxu0 0.0
    %376 = vmatpush1.msra.mxu0 0.0
    %377 = vmatprep.subr.mxu0 0.0
    %378 = vmatpush1.msra.mxu0 0.0
    %379 = vmatprep.subr.mxu0 0.0
    %380 = vmatpush1.msra.mxu0 0.0
    %381 = vmatprep.subr.mxu0 0.0
    %382 = vmatpush1.msra.mxu0 0.0
    %383 = vmatprep.subr.mxu0 0.0
    %384 = vmatpush1.msra.mxu0 0.0
    %385 = vmatprep.subr.mxu0 0.0
    %386 = vmatpush1.msra.mxu0 0.0
    %387 = vmatprep.subr.mxu0 0.0
    %388 = vmatpush1.msra.mxu0 0.0
    %389 = vmatprep.subr.mxu0 0.0
    %390 = vmatpush1.msra.mxu0 0.0
    %391 = vmatprep.subr.mxu0 0.0
    %392 = vmatpush1.msra.mxu0 0.0
    %393 = vmatprep.subr.mxu0 0.0
    %394 = vmatpush1.msra.mxu0 0.0
    %395 = vmatprep.subr.mxu0 0.0
    %396 = vmatpush1.msra.mxu0 0.0
    %397 = vmatprep.subr.mxu0 0.0
    %398 = vmatpush1.msra.mxu0 0.0
    %399 = vmatprep.subr.mxu0 0.0
    %400 = vmatpush1.msra.mxu0 0.0
    %401 = vmatprep.subr.mxu0 0.0
    %402 = vmatpush1.msra.mxu0 0.0
    %403 = vmatprep.subr.mxu0 0.0
    %404 = vmatpush1.msra.mxu0 0.0
    %405 = vmatprep.subr.mxu0 0.0
    %406 = vmatpush1.msra.mxu0 0.0
    %407 = vmatprep.subr.mxu0 0.0
    %408 = vmatpush1.msra.mxu0 0.0
    %409 = vmatprep.subr.mxu0 0.0
    %410 = vmatpush1.msra.mxu0 0.0
    %411 = vmatprep.subr.mxu0 0.0
    %412 = vmatpush1.msra.mxu0 0.0
    %413 = vmatprep.subr.mxu0 0.0
    %414 = vmatpush1.msra.mxu0 0.0
    %415 = vmatprep.subr.mxu0 0.0
    %416 = vmatpush1.msra.mxu0 0.0
    %417 = vmatprep.subr.mxu0 0.0
    %418 = vmatpush1.msra.mxu0 0.0
    %419 = vmatprep.subr.mxu0 0.0
    %420 = vmatpush1.msra.mxu0 0.0
    %421 = vmatprep.subr.mxu0 0.0
    %422 = vmatpush1.msra.mxu0 0.0
    %423 = vmatprep.subr.mxu0 0.0
    %424 = vmatpush1.msra.mxu0 0.0
    %425 = vmatprep.subr.mxu0 0.0
    %426 = vmatpush1.msra.mxu0 0.0
    %427 = vmatprep.subr.mxu0 0.0
    %428 = vmatpush1.msra.mxu0 0.0
    %429 = vmatprep.subr.mxu0 0.0
    %430 = vmatpush1.msra.mxu0 0.0
    %431 = vmatprep.subr.mxu0 0.0
    %432 = vmatpush1.msra.mxu0 0.0
    %433 = vmatprep.mubr.f32.mxu0 0.0
    %434 = vmatmul.mubr.f32.gmra.mrb[0].mxu0 %v367
    %v435 = vpop.f32.mrb[0].mxu0
    %v436 = vadd.f32 0.0, %v435
    %v437 = vpop.f32.mrb[0].mxu0
    %438 = vdwg.mxu0
    %440 = vrot.lane.b32.xlu0 %v226, 8
    %v441 = vpop.permute.xlu0 %440
    %444 = vrot.lane.b32.xlu0 %v331, 16
    %v445 = vpop.permute.xlu0 %444
    %448 = vrot.lane.b32.xlu0 %v436, 24
    %v449 = vpop.permute.xlu0 %448
    %vm451 = vcmask 64512
    %v452 = vsel %vm451, %v121, %v441
    %v453 = vsel %vm51, %v452, %v445
    %vm454 = vcmask 195584
    %v455 = vsel %vm454, %v453, %v449
    %vm456 = vcmask 261120
    %457 = vst.msk [vmem:[#allocation2] sm:$0xff] %vm456, %v455
    // Predicated region
    $region10: #{tpu_custom_call.1} parent=1 // pred_check
      _
    $region11: #{tpu_custom_call.1} parent=1 // pred_check_branch
      %459 = sbr.rel (0) target = $region13
    $region12: #{tpu_custom_call.1} parent=1 // pred_region
      %s461 = ssub.s32 128, 128
      %462 = vsyncadd [#allocation3], %s461
      %s464 = sshll.u32 [#allocation2], 4
      %s465 = int_to_ptr.vmem [resolvable:$true] %s464
      %467 = dma.vmem_to_hbm [thread:$0]  %s465, 128, %s2, [#allocation3]
    $region13: #{tpu_custom_call.1} parent=1 // pred_fallthru
      _
    // Predicated region
    $region14: #{tpu_custom_call.1} parent=1 // pred_check
      _
    $region15: #{tpu_custom_call.1} parent=1 // pred_check_branch
      %469 = sbr.rel (0) target = $region17
    $region16: #{tpu_custom_call.1} parent=1 // pred_region
      %470 = dma.done [#allocation3], 128
    $region17: #{tpu_custom_call.1} parent=1 // pred_fallthru
      _
    %471 = vsyncpa [#allocation3], 1

</llo_original>
